<compile_context>
chip_gen: v5e
topology: v5e:2x2
jax: 0.10.0
libtpu: 0.0.40
codegen_flags: <defaults>
</compile_context>

<pallas_src>
import functools
from collections import OrderedDict

import jax
import jax.numpy as jnp
from jax.experimental import pallas as pl
from jax.experimental.pallas import tpu as pltpu

BN_EPS = 1e-5


def _fused_heads_kernel(patch_ref, w3_ref, b3_ref, w1_ref, b1_ref, out_ref,
                        *, N, HW):
    """One task's head for the whole batch, as two MXU GEMMs.

    patch_ref : (N*HW, 9*Cin)   im2col patches of concat(decoder, encoder)
    w3_ref    : (9*Cin, Cmid)   conv3x3 weights with eval-mode BN folded in
    b3_ref    : (1, Cmid)       BN-folded bias
    w1_ref    : (Cmid, Coutp)   conv1x1 weights (Cout zero-padded to Coutp)
    b1_ref    : (1, Coutp)      conv1x1 bias    (zero-padded)
    out_ref   : (N, Coutp, HW)  NCHW(-flattened) output, lane-dense last dim
    """
    # conv3x3 (+BN) as a single im2col GEMM: K = 9*Cin instead of 9 K=Cin dots.
    y = jnp.dot(patch_ref[...], w3_ref[...], preferred_element_type=jnp.float32)
    y = jnp.maximum(y + b3_ref[...], 0.0)                       # bias + ReLU
    # conv1x1 + bias.
    z = jnp.dot(y, w1_ref[...], preferred_element_type=jnp.float32) + b1_ref[...]
    # Lane-dense, already-NCHW store: (Coutp, HW) per image (HW lanes) instead
    # of a masked (H, W, Cout<=8) store.  N is small and static.
    for n in range(N):
        out_ref[n] = z[n * HW:(n + 1) * HW, :].T.astype(out_ref.dtype)


def _im2col_3x3(x_nhwc):
    """(N, H, W, C) -> (N*H*W, 9*C) patches, tap order (ky, kx, c)."""
    N, H, W, C = x_nhwc.shape
    xp = jnp.pad(x_nhwc, ((0, 0), (1, 1), (1, 1), (0, 0)))
    taps = [xp[:, ky:ky + H, kx:kx + W, :] for ky in range(3) for kx in range(3)]
    return jnp.concatenate(taps, axis=-1).reshape(N * H * W, 9 * C)


def _fold_bn(p):
    """Fold eval-mode BatchNorm into the conv3x3 -> (w3f (9*Cin, Cmid), b3)."""
    scale = p["gamma"][0] * jax.lax.rsqrt(p["var"][0] + BN_EPS)        # (Cmid,)
    kh, kw, cin, cmid = p["w3"].shape
    w3f = (p["w3"] * scale).reshape(kh * kw * cin, cmid)
    b3 = (p["beta"][0] - p["mean"][0] * scale).reshape(1, cmid)
    return w3f, b3


def run_heads(tasks, task_to_de_feats, task_to_en_feats, params):
    """All task heads (pre-upsample) in ONE pallas_call.

    Returns OrderedDict{task: (N, Cout_task, H, W)} float32.
    """
    N, _, H, W = task_to_de_feats[tasks[0]].shape
    HW = H * W

    patch_list, w3_list, b3_list, w1_list, b1_list, couts = [], [], [], [], [], []
    for task in tasks:
        de = task_to_de_feats[task]                  # (N, C_de, H, W)  NCHW
        en = task_to_en_feats[task]                  # (N, C_en, H, W)  NCHW
        # concat + transpose + pad fuse into the XLA-side im2col build.
        x_nhwc = jnp.transpose(jnp.concatenate([de, en], axis=1), (0, 2, 3, 1))
        patch_list.append(_im2col_3x3(x_nhwc))       # (N*HW, 9*Cin)
        w3f, b3 = _fold_bn(params[task])
        w3_list.append(w3f)
        b3_list.append(b3)
        w1_list.append(params[task]["w1"])
        b1_list.append(params[task]["b1"])
        couts.append(params[task]["w1"].shape[-1])

    # Pad all task Cout to a common sublane-friendly width and stack every
    # per-task tensor along a leading task axis -> one kernel call total.
    Coutp = max(8, -(-max(couts) // 8) * 8)
    patches = jnp.stack(patch_list)                                   # (T, N*HW, 9*Cin)
    w3s = jnp.stack(w3_list)                                          # (T, 9*Cin, Cmid)
    b3s = jnp.stack(b3_list)                                          # (T, 1, Cmid)
    w1s = jnp.stack([jnp.pad(w, ((0, 0), (0, Coutp - w.shape[1])))
                     for w in w1_list])                               # (T, Cmid, Coutp)
    b1s = jnp.stack([jnp.pad(b, ((0, 0), (0, Coutp - b.shape[1])))
                     for b in b1_list])                               # (T, 1, Coutp)

    T, NHW, KC = patches.shape
    Cmid = w3s.shape[-1]

    kernel = functools.partial(_fused_heads_kernel, N=N, HW=HW)
    y_all = pl.pallas_call(
        kernel,
        out_shape=jax.ShapeDtypeStruct((T, N, Coutp, HW), jnp.float32),
        grid=(T,),
        in_specs=[
            pl.BlockSpec((None, NHW, KC), lambda t: (t, 0, 0)),
            pl.BlockSpec((None, KC, Cmid), lambda t: (t, 0, 0)),
            pl.BlockSpec((None, 1, Cmid), lambda t: (t, 0, 0)),
            pl.BlockSpec((None, Cmid, Coutp), lambda t: (t, 0, 0)),
            pl.BlockSpec((None, 1, Coutp), lambda t: (t, 0, 0)),
        ],
        out_specs=pl.BlockSpec((None, N, Coutp, HW), lambda t: (t, 0, 0, 0)),
        # Per-task steps are tiny: keep the grid sequential on one TensorCore;
        # core-parallel sharding (v7x) would be pure overhead at this size.
        compiler_params=pltpu.CompilerParams(
            dimension_semantics=("arbitrary",)),
    )(patches, w3s, b3s, w1s, b1s)

    results = OrderedDict()
    for ti, task in enumerate(tasks):
        c = couts[ti]
        results[task] = y_all[ti, :, :c, :].reshape(N, c, H, W)
    return results


def uninet_head_forward(tasks, task_to_de_feats, task_to_en_feats, image_size,
                        params):
    """Mirrors UninetHead.forward: per-task head -> upsample to image_size."""
    heads = run_heads(tasks, task_to_de_feats, task_to_en_feats, params)
    results = OrderedDict()
    for task, y in heads.items():
        # TODO(synk): the bilinear upsample could be fused into the kernel
        #             epilogue; it is kept in XLA because image_size is
        #             arbitrary and the PyTorch align_corners flag is unknown
        #             (default half-pixel == align_corners=False assumed).
        results[task] = jax.image.resize(
            y, (y.shape[0], y.shape[1], image_size[0], image_size[1]),
            method="bilinear")
    return results


def _reference_head(x_nhwc, p):
    """Pure-JAX reference of the fused head (pre-upsample), NHWC output."""
    out = jax.lax.conv_general_dilated(
        x_nhwc, p["w3"], window_strides=(1, 1), padding="SAME",
        dimension_numbers=("NHWC", "HWIO", "NHWC"))
    inv_std = jax.lax.rsqrt(p["var"][0] + BN_EPS)
    out = (out - p["mean"][0]) * (p["gamma"][0] * inv_std) + p["beta"][0]
    out = jnp.maximum(out, 0.0)
    out = jnp.einsum("nhwc,cd->nhwd", out, p["w1"]) + p["b1"][0]
    return out


if __name__ == "__main__":
    key = jax.random.PRNGKey(0)
    N, C_de, C_en, H, W = 2, 4, 4, 16, 16
    image_size = (32, 32)
    tasks = ("segment", "depth", "sur_nor")
    task_out_ch = {"segment": 8, "depth": 1, "sur_nor": 3}
    Cmid = 32
    Cin = C_de + C_en
    # NOTE: cfg.MODEL.ENCODER.NUM_EN_FEATURES - 1 only controls how many
    # encoder levels the (unshown) head constructors consume; a single encoder
    # feature map per task is used here.

    keys = jax.random.split(key, 32)
    kidx = iter(range(32))

    params = {}
    for task in tasks:
        Cout = task_out_ch[task]
        params[task] = dict(
            w3=0.1 * jax.random.normal(keys[next(kidx)], (3, 3, Cin, Cmid),
                                       jnp.float32),
            gamma=1.0 + 0.1 * jax.random.normal(keys[next(kidx)], (1, Cmid),
                                                jnp.float32),
            beta=0.1 * jax.random.normal(keys[next(kidx)], (1, Cmid),
                                         jnp.float32),
            mean=0.1 * jax.random.normal(keys[next(kidx)], (1, Cmid),
                                         jnp.float32),
            var=1.0 + jax.random.uniform(keys[next(kidx)], (1, Cmid),
                                         jnp.float32),
            w1=0.1 * jax.random.normal(keys[next(kidx)], (Cmid, Cout),
                                       jnp.float32),
            b1=0.02 * jax.random.normal(keys[next(kidx)], (1, Cout),
                                        jnp.float32),
        )

    task_to_de_feats = {
        t: jax.random.normal(keys[next(kidx)], (N, C_de, H, W), jnp.float32)
        for t in tasks
    }
    task_to_en_feats = {
        t: jax.random.normal(keys[next(kidx)], (N, C_en, H, W), jnp.float32)
        for t in tasks
    }

    results = uninet_head_forward(tasks, task_to_de_feats, task_to_en_feats,
                                  image_size, params)
    for t in tasks:
        jax.block_until_ready(results[t])
        assert results[t].shape == (N, task_out_ch[t], *image_size), t

    # Sanity check the kernel against a pure-JAX reference (pre-upsample).
    got = run_heads(tasks, task_to_de_feats, task_to_en_feats, params)
    for t in tasks:
        x = jnp.concatenate([task_to_de_feats[t], task_to_en_feats[t]], axis=1)
        x_nhwc = jnp.transpose(x, (0, 2, 3, 1))
        want = jnp.transpose(_reference_head(x_nhwc, params[t]), (0, 3, 1, 2))
        assert jnp.allclose(got[t], want, atol=2e-3, rtol=2e-3), t

    print("KERNEL_OK")
</pallas_src>

<mosaic_0001>
module attributes {stable_mosaic.version = 11 : i64} {
  func.func @_fused_heads_kernel(%arg0: i32, %arg1: memref<1x512x72xf32, #tpu.memory_space<vmem>>, %arg2: memref<1x72x32xf32, #tpu.memory_space<vmem>>, %arg3: memref<1x1x32xf32, #tpu.memory_space<vmem>>, %arg4: memref<1x32x8xf32, #tpu.memory_space<vmem>>, %arg5: memref<1x1x8xf32, #tpu.memory_space<vmem>>, %arg6: memref<1x2x8x256xf32, #tpu.memory_space<vmem>>) attributes {dimension_semantics = [#tpu.dimension_semantics<arbitrary>], iteration_bounds = array<i64: 3>, scalar_prefetch = 0 : i64, scratch_operands = 0 : i64, tpu.core_type = #tpu.core_type<tc>, window_params = [{transform_indices = @transform_0, window_bounds = array<i64: 1, 512, 72>}, {transform_indices = @transform_1, window_bounds = array<i64: 1, 72, 32>}, {transform_indices = @transform_2, window_bounds = array<i64: 1, 1, 32>}, {transform_indices = @transform_3, window_bounds = array<i64: 1, 32, 8>}, {transform_indices = @transform_4, window_bounds = array<i64: 1, 1, 8>}, {transform_indices = @transform_5, window_bounds = array<i64: 1, 2, 8, 256>}]} {
    %c0 = arith.constant 0 : index
    %c0_0 = arith.constant 0 : index
    %c0_1 = arith.constant 0 : index
    %0 = vector.load %arg1[%c0, %c0_0, %c0_1] : memref<1x512x72xf32, #tpu.memory_space<vmem>>, vector<1x512x72xf32>
    %1 = vector.shape_cast %0 : vector<1x512x72xf32> to vector<512x72xf32>
    %c0_2 = arith.constant 0 : index
    %c0_3 = arith.constant 0 : index
    %c0_4 = arith.constant 0 : index
    %2 = vector.load %arg2[%c0_2, %c0_3, %c0_4] : memref<1x72x32xf32, #tpu.memory_space<vmem>>, vector<1x72x32xf32>
    %3 = vector.shape_cast %2 : vector<1x72x32xf32> to vector<72x32xf32>
    %cst = arith.constant dense<0.000000e+00> : vector<512x32xf32>
    %4 = tpu.matmul %1, %3, %cst {dimension_numbers = #tpu.dot_dimension_numbers<[1], [0], [0], [1], [0, 0, 1, 1], [], []>} : vector<512x72xf32>, vector<72x32xf32>, vector<512x32xf32> -> vector<512x32xf32>
    %c0_5 = arith.constant 0 : index
    %c0_6 = arith.constant 0 : index
    %c0_7 = arith.constant 0 : index
    %5 = vector.load %arg3[%c0_5, %c0_6, %c0_7] : memref<1x1x32xf32, #tpu.memory_space<vmem>>, vector<1x1x32xf32>
    %6 = vector.shape_cast %5 : vector<1x1x32xf32> to vector<1x32xf32>
    %7 = vector.broadcast %6 : vector<1x32xf32> to vector<512x32xf32>
    %8 = arith.addf %4, %7 : vector<512x32xf32>
    %cst_8 = arith.constant 0.000000e+00 : f32
    %9 = vector.broadcast %cst_8 : f32 to vector<512x32xf32>
    %10 = arith.maximumf %8, %9 : vector<512x32xf32>
    %c0_9 = arith.constant 0 : index
    %c0_10 = arith.constant 0 : index
    %c0_11 = arith.constant 0 : index
    %11 = vector.load %arg4[%c0_9, %c0_10, %c0_11] : memref<1x32x8xf32, #tpu.memory_space<vmem>>, vector<1x32x8xf32>
    %12 = vector.shape_cast %11 : vector<1x32x8xf32> to vector<32x8xf32>
    %cst_12 = arith.constant dense<0.000000e+00> : vector<512x8xf32>
    %13 = tpu.matmul %10, %12, %cst_12 {dimension_numbers = #tpu.dot_dimension_numbers<[1], [0], [0], [1], [0, 0, 1, 1], [], []>} : vector<512x32xf32>, vector<32x8xf32>, vector<512x8xf32> -> vector<512x8xf32>
    %c0_13 = arith.constant 0 : index
    %c0_14 = arith.constant 0 : index
    %c0_15 = arith.constant 0 : index
    %14 = vector.load %arg5[%c0_13, %c0_14, %c0_15] : memref<1x1x8xf32, #tpu.memory_space<vmem>>, vector<1x1x8xf32>
    %15 = vector.shape_cast %14 : vector<1x1x8xf32> to vector<1x8xf32>
    %16 = vector.broadcast %15 : vector<1x8xf32> to vector<512x8xf32>
    %17 = arith.addf %13, %16 : vector<512x8xf32>
    %18 = vector.extract_strided_slice %17 {offsets = [0, 0], sizes = [256, 8], strides = [1, 1]} : vector<512x8xf32> to vector<256x8xf32>
    %19 = tpu.transpose %18, [1, 0] : vector<256x8xf32> -> vector<8x256xf32>
    %c0_16 = arith.constant 0 : index
    %c0_17 = arith.constant 0 : index
    %c0_18 = arith.constant 0 : index
    %c0_19 = arith.constant 0 : index
    %20 = vector.load %arg6[%c0_16, %c0_17, %c0_18, %c0_19] : memref<1x2x8x256xf32, #tpu.memory_space<vmem>>, vector<1x1x8x256xf32>
    %21 = vector.shape_cast %20 : vector<1x1x8x256xf32> to vector<8x256xf32>
    %22 = vector.shape_cast %19 : vector<8x256xf32> to vector<1x1x8x256xf32>
    tpu.vector_store %arg6[%c0_16, %c0_17, %c0_18, %c0_19], %22 {strides = array<i32>} : memref<1x2x8x256xf32, #tpu.memory_space<vmem>>, vector<1x1x8x256xf32>,
    %23 = vector.extract_strided_slice %17 {offsets = [256, 0], sizes = [256, 8], strides = [1, 1]} : vector<512x8xf32> to vector<256x8xf32>
    %24 = tpu.transpose %23, [1, 0] : vector<256x8xf32> -> vector<8x256xf32>
    %c0_20 = arith.constant 0 : index
    %c1 = arith.constant 1 : index
    %c0_21 = arith.constant 0 : index
    %c0_22 = arith.constant 0 : index
    %25 = vector.load %arg6[%c0_20, %c1, %c0_21, %c0_22] : memref<1x2x8x256xf32, #tpu.memory_space<vmem>>, vector<1x1x8x256xf32>
    %26 = vector.shape_cast %25 : vector<1x1x8x256xf32> to vector<8x256xf32>
    %27 = vector.shape_cast %24 : vector<8x256xf32> to vector<1x1x8x256xf32>
    tpu.vector_store %arg6[%c0_20, %c1, %c0_21, %c0_22], %27 {strides = array<i32>} : memref<1x2x8x256xf32, #tpu.memory_space<vmem>>, vector<1x1x8x256xf32>,
    return
  }
  func.func @transform_0(%arg0: i32) -> (i32, i32, i32) {
    %c0_i32 = arith.constant 0 : i32
    %c0_i32_0 = arith.constant 0 : i32
    %c0_i32_1 = arith.constant 0 : i32
    return %arg0, %c0_i32, %c0_i32_0 : i32, i32, i32
  }
  func.func @transform_1(%arg0: i32) -> (i32, i32, i32) {
    %c0_i32 = arith.constant 0 : i32
    %c0_i32_0 = arith.constant 0 : i32
    %c0_i32_1 = arith.constant 0 : i32
    return %arg0, %c0_i32, %c0_i32_0 : i32, i32, i32
  }
  func.func @transform_2(%arg0: i32) -> (i32, i32, i32) {
    %c0_i32 = arith.constant 0 : i32
    %c0_i32_0 = arith.constant 0 : i32
    %c0_i32_1 = arith.constant 0 : i32
    return %arg0, %c0_i32, %c0_i32_0 : i32, i32, i32
  }
  func.func @transform_3(%arg0: i32) -> (i32, i32, i32) {
    %c0_i32 = arith.constant 0 : i32
    %c0_i32_0 = arith.constant 0 : i32
    %c0_i32_1 = arith.constant 0 : i32
    return %arg0, %c0_i32, %c0_i32_0 : i32, i32, i32
  }
  func.func @transform_4(%arg0: i32) -> (i32, i32, i32) {
    %c0_i32 = arith.constant 0 : i32
    %c0_i32_0 = arith.constant 0 : i32
    %c0_i32_1 = arith.constant 0 : i32
    return %arg0, %c0_i32, %c0_i32_0 : i32, i32, i32
  }
  func.func @transform_5(%arg0: i32) -> (i32, i32, i32, i32) {
    %c0_i32 = arith.constant 0 : i32
    %c0_i32_0 = arith.constant 0 : i32
    %c0_i32_1 = arith.constant 0 : i32
    %c0_i32_2 = arith.constant 0 : i32
    return %arg0, %c0_i32, %c0_i32_0, %c0_i32_1 : i32, i32, i32, i32
  }
}

</mosaic_0001>

<llo_original>
// kernel: tpu_custom_call.1
$region0: #{tpu_custom_call.1}
  #allocation0 [shape = 'u32[]', space=smem, size = 0x4, offset = 0x4, fixed_abs, tag = 'smem constant byte address 0x4 - core index']
  #allocation1 [shape = 'u32[72,128]{1,0:T(1,128)}', space=vmem, size = 0x9000, scoped, tag = 'internal scratch']
  %s0 = inlined_call_operand.vmem [shape: f32[3,512,72], index: 0, kind: input, shape index: {}]
  %s1 = inlined_call_operand.vmem [shape: f32[3,72,32], index: 1, kind: input, shape index: {}]
  %s2 = inlined_call_operand.vmem [shape: f32[3,1,32], index: 2, kind: input, shape index: {}]
  %s3 = inlined_call_operand.vmem [shape: f32[3,32,8], index: 3, kind: input, shape index: {}]
  %s4 = inlined_call_operand.vmem [shape: f32[3,1,8], index: 4, kind: input, shape index: {}]
  %s5 = inlined_call_operand.hbm [shape: f32[3,2,8,256], index: 5, kind: output, shape index: {}]
  %s6 = sld [smem:[#allocation0]]
  $region53: #{tpu_custom_call.1} parent=0
    _
  %s8 = ssub.s32 1, %s6
  %s9 = scalar_select 0, %s8, %s6
  $region1: #{tpu_custom_call.1} parent=0
    #allocation2 [shape = 'u8[32768]{0}', space=vmem, size = 0x8000, scoped, tag = 'output window, operand 0']
    #allocation3 [shape = 's32[2]{0}', space=sflag, size = 0x8, scoped, tag = 'scoped memory for tpu_custom_call.1']
    %10 = vsyncpa [#allocation3], 0
    %s11 = scalar_lea.sflag [#allocation3], 1
    %12 = vsyncpa %s11, 0
    loop: start=0, step=1, limit=5
    $region2: #{tpu_custom_call.1} parent=1 // loop_pre_header
      _
    $region3: #{tpu_custom_call.1} parent=1 // loop_header
      %s14 = sphi 0, %s18
      %p15 = scmp.ge.s32.totalorder %s14, 5
      %s24 = sphi 0, %s26
      %s27 = sphi 0, %s24
      %s28 = sphi 0, %s27
      %s44 = sphi 0, %s28
      %s50 = sphi 0, %s52
      %s53 = sphi 0, %s50
      %s54 = sphi 0, %s53
      %s70 = sphi 0, %s54
      %s76 = sphi 0, %s78
      %s79 = sphi 0, %s76
      %s80 = sphi 0, %s79
      %s96 = sphi 0, %s80
      %s102 = sphi 0, %s104
      %s105 = sphi 0, %s102
      %s106 = sphi 0, %s105
      %s122 = sphi 0, %s106
      %s128 = sphi 0, %s130
      %s131 = sphi 0, %s128
      %s132 = sphi 0, %s131
      %s148 = sphi 0, %s132
      %s154 = sphi 0, %s156
      %s157 = sphi 0, %s154
      %s158 = sphi 0, %s157
      %s174 = sphi 0, %s158
    $region4: #{tpu_custom_call.1} parent=1 // loop_header_branch
      %17 = sbr.rel (%p15) target = $region8
    $region5: #{tpu_custom_call.1} parent=1 // loop_body
      %s19 = ssub.s32 %s14, 1
      %s20 = ssub.s32 %s14, 2
      %s21 = sadd.s32 %s14, 1
      %s22 = ssub.s32 %s14, %s21
      %p23 = scmp.eq.s32.totalorder %s22, 0
      %s25 = sadd.s32 %s24, 1
      %s26 = scalar_select %p23, %s24, %s25
      %p29 = pneg %p23
      %p30 = scmp.eq.s32.totalorder %s14, 2
      %p31 = por %p29, %p30
      %p32 = scmp.ne.s32.totalorder %s24, %s27
      %p33 = scmp.eq.s32.totalorder %s14, 0
      %p34 = por %p32, %p33
      %p35 = scmp.ne.s32.totalorder %s24, %s27
      %p36 = scmp.eq.s32.totalorder %s19, 2
      %p37 = por %p35, %p36
      %p38 = scmp.ne.s32.totalorder %s27, %s28
      %p39 = scmp.eq.s32.totalorder %s19, 0
      %p40 = por %p38, %p39
      %p41 = scmp.ne.s32.totalorder %s27, %s28
      %p42 = scmp.eq.s32.totalorder %s20, 2
      %p43 = por %p41, %p42
      %p45 = scmp.ne.s32.totalorder %s28, %s44
      %p46 = scmp.eq.s32.totalorder %s20, 0
      %p47 = por %p45, %p46
      %s48 = ssub.s32 %s14, %s21
      %p49 = scmp.eq.s32.totalorder %s48, 0
      %s51 = sadd.s32 %s50, 1
      %s52 = scalar_select %p49, %s50, %s51
      %p55 = pneg %p49
      %p56 = scmp.eq.s32.totalorder %s14, 2
      %p57 = por %p55, %p56
      %p58 = scmp.ne.s32.totalorder %s50, %s53
      %p59 = scmp.eq.s32.totalorder %s14, 0
      %p60 = por %p58, %p59
      %p61 = scmp.ne.s32.totalorder %s50, %s53
      %p62 = scmp.eq.s32.totalorder %s19, 2
      %p63 = por %p61, %p62
      %p64 = scmp.ne.s32.totalorder %s53, %s54
      %p65 = scmp.eq.s32.totalorder %s19, 0
      %p66 = por %p64, %p65
      %p67 = scmp.ne.s32.totalorder %s53, %s54
      %p68 = scmp.eq.s32.totalorder %s20, 2
      %p69 = por %p67, %p68
      %p71 = scmp.ne.s32.totalorder %s54, %s70
      %p72 = scmp.eq.s32.totalorder %s20, 0
      %p73 = por %p71, %p72
      %s74 = ssub.s32 %s14, %s21
      %p75 = scmp.eq.s32.totalorder %s74, 0
      %s77 = sadd.s32 %s76, 1
      %s78 = scalar_select %p75, %s76, %s77
      %p81 = pneg %p75
      %p82 = scmp.eq.s32.totalorder %s14, 2
      %p83 = por %p81, %p82
      %p84 = scmp.ne.s32.totalorder %s76, %s79
      %p85 = scmp.eq.s32.totalorder %s14, 0
      %p86 = por %p84, %p85
      %p87 = scmp.ne.s32.totalorder %s76, %s79
      %p88 = scmp.eq.s32.totalorder %s19, 2
      %p89 = por %p87, %p88
      %p90 = scmp.ne.s32.totalorder %s79, %s80
      %p91 = scmp.eq.s32.totalorder %s19, 0
      %p92 = por %p90, %p91
      %p93 = scmp.ne.s32.totalorder %s79, %s80
      %p94 = scmp.eq.s32.totalorder %s20, 2
      %p95 = por %p93, %p94
      %p97 = scmp.ne.s32.totalorder %s80, %s96
      %p98 = scmp.eq.s32.totalorder %s20, 0
      %p99 = por %p97, %p98
      %s100 = ssub.s32 %s14, %s21
      %p101 = scmp.eq.s32.totalorder %s100, 0
      %s103 = sadd.s32 %s102, 1
      %s104 = scalar_select %p101, %s102, %s103
      %p107 = pneg %p101
      %p108 = scmp.eq.s32.totalorder %s14, 2
      %p109 = por %p107, %p108
      %p110 = scmp.ne.s32.totalorder %s102, %s105
      %p111 = scmp.eq.s32.totalorder %s14, 0
      %p112 = por %p110, %p111
      %p113 = scmp.ne.s32.totalorder %s102, %s105
      %p114 = scmp.eq.s32.totalorder %s19, 2
      %p115 = por %p113, %p114
      %p116 = scmp.ne.s32.totalorder %s105, %s106
      %p117 = scmp.eq.s32.totalorder %s19, 0
      %p118 = por %p116, %p117
      %p119 = scmp.ne.s32.totalorder %s105, %s106
      %p120 = scmp.eq.s32.totalorder %s20, 2
      %p121 = por %p119, %p120
      %p123 = scmp.ne.s32.totalorder %s106, %s122
      %p124 = scmp.eq.s32.totalorder %s20, 0
      %p125 = por %p123, %p124
      %s126 = ssub.s32 %s14, %s21
      %p127 = scmp.eq.s32.totalorder %s126, 0
      %s129 = sadd.s32 %s128, 1
      %s130 = scalar_select %p127, %s128, %s129
      %p133 = pneg %p127
      %p134 = scmp.eq.s32.totalorder %s14, 2
      %p135 = por %p133, %p134
      %p136 = scmp.ne.s32.totalorder %s128, %s131
      %p137 = scmp.eq.s32.totalorder %s14, 0
      %p138 = por %p136, %p137
      %p139 = scmp.ne.s32.totalorder %s128, %s131
      %p140 = scmp.eq.s32.totalorder %s19, 2
      %p141 = por %p139, %p140
      %p142 = scmp.ne.s32.totalorder %s131, %s132
      %p143 = scmp.eq.s32.totalorder %s19, 0
      %p144 = por %p142, %p143
      %p145 = scmp.ne.s32.totalorder %s131, %s132
      %p146 = scmp.eq.s32.totalorder %s20, 2
      %p147 = por %p145, %p146
      %p149 = scmp.ne.s32.totalorder %s132, %s148
      %p150 = scmp.eq.s32.totalorder %s20, 0
      %p151 = por %p149, %p150
      %s152 = ssub.s32 %s14, %s21
      %p153 = scmp.eq.s32.totalorder %s152, 0
      %s155 = sadd.s32 %s154, 1
      %s156 = scalar_select %p153, %s154, %s155
      %p159 = pneg %p153
      %p160 = scmp.eq.s32.totalorder %s14, 2
      %p161 = por %p159, %p160
      %p162 = scmp.ne.s32.totalorder %s154, %s157
      %p163 = scmp.eq.s32.totalorder %s14, 0
      %p164 = por %p162, %p163
      %p165 = scmp.ne.s32.totalorder %s154, %s157
      %p166 = scmp.eq.s32.totalorder %s19, 2
      %p167 = por %p165, %p166
      %p168 = scmp.ne.s32.totalorder %s157, %s158
      %p169 = scmp.eq.s32.totalorder %s19, 0
      %p170 = por %p168, %p169
      %p171 = scmp.ne.s32.totalorder %s157, %s158
      %p172 = scmp.eq.s32.totalorder %s20, 2
      %p173 = por %p171, %p172
      %p175 = scmp.ne.s32.totalorder %s158, %s174
      %p176 = scmp.eq.s32.totalorder %s20, 0
      %p177 = por %p175, %p176
      %p178 = scmp.le.s32.totalorder 1, %s14
      %p179 = scmp.lt.s32.totalorder %s14, 4
      %p180 = pnand %p178, %p179
      %p181 = pneg %p180
      // Predicated region
      $region9: #{tpu_custom_call.1} parent=5 // pred_check
        _
      $region10: #{tpu_custom_call.1} parent=5 // pred_check_branch
        %183 = sbr.rel (%p180) target = $region12
      $region11: #{tpu_custom_call.1} parent=5 // pred_region
        %s184 = ssub.s32 %s14, 1
      $region12: #{tpu_custom_call.1} parent=5 // pred_fallthru
        _
      %p185 = scmp.lt.s32.totalorder %s14, 3
      // Predicated region
      $region13: #{tpu_custom_call.1} parent=5 // pred_check
        %p186 = pneg %p185
      $region14: #{tpu_custom_call.1} parent=5 // pred_check_branch
        %188 = sbr.rel (%p186) target = $region16
      $region15: #{tpu_custom_call.1} parent=5 // pred_region
        // Predicated region
        $region17: #{tpu_custom_call.1} parent=15 // pred_check
          %p189 = pneg %p34
        $region18: #{tpu_custom_call.1} parent=15 // pred_check_branch
          %191 = sbr.rel (%p189) target = $region20
        $region19: #{tpu_custom_call.1} parent=15 // pred_region
          %p192 = scmp.lt.s32.totalorder %s14, 2
          %s193 = scalar_select %p192, %s14, 2
          %s194 = smul.addr %s193, 64
          %s195 = smul.addr %s194, 8
          %s196 = scalar_lea.vmem %s0, %s195
        $region20: #{tpu_custom_call.1} parent=15 // pred_fallthru
          _
        // Predicated region
        $region21: #{tpu_custom_call.1} parent=15 // pred_check
          %p197 = pneg %p60
        $region22: #{tpu_custom_call.1} parent=15 // pred_check_branch
          %199 = sbr.rel (%p197) target = $region24
        $region23: #{tpu_custom_call.1} parent=15 // pred_region
          %p200 = scmp.lt.s32.totalorder %s14, 2
          %s201 = scalar_select %p200, %s14, 2
          %s202 = smul.addr %s201, 9
          %s203 = smul.addr %s202, 8
          %s204 = scalar_lea.vmem %s1, %s203
        $region24: #{tpu_custom_call.1} parent=15 // pred_fallthru
          _
        // Predicated region
        $region25: #{tpu_custom_call.1} parent=15 // pred_check
          %p205 = pneg %p86
        $region26: #{tpu_custom_call.1} parent=15 // pred_check_branch
          %207 = sbr.rel (%p205) target = $region28
        $region27: #{tpu_custom_call.1} parent=15 // pred_region
          %p208 = scmp.lt.s32.totalorder %s14, 2
          %s209 = scalar_select %p208, %s14, 2
          %s210 = scalar_lea.vmem %s2, %s209
        $region28: #{tpu_custom_call.1} parent=15 // pred_fallthru
          _
        // Predicated region
        $region29: #{tpu_custom_call.1} parent=15 // pred_check
          %p211 = pneg %p112
        $region30: #{tpu_custom_call.1} parent=15 // pred_check_branch
          %213 = sbr.rel (%p211) target = $region32
        $region31: #{tpu_custom_call.1} parent=15 // pred_region
          %p214 = scmp.lt.s32.totalorder %s14, 2
          %s215 = scalar_select %p214, %s14, 2
          %s216 = smul.addr %s215, 4
          %s217 = smul.addr %s216, 8
          %s218 = scalar_lea.vmem %s3, %s217
        $region32: #{tpu_custom_call.1} parent=15 // pred_fallthru
          _
        // Predicated region
        $region33: #{tpu_custom_call.1} parent=15 // pred_check
          %p219 = pneg %p138
        $region34: #{tpu_custom_call.1} parent=15 // pred_check_branch
          %221 = sbr.rel (%p219) target = $region36
        $region35: #{tpu_custom_call.1} parent=15 // pred_region
          %p222 = scmp.lt.s32.totalorder %s14, 2
          %s223 = scalar_select %p222, %s14, 2
          %s224 = scalar_lea.vmem %s4, %s223
        $region36: #{tpu_custom_call.1} parent=15 // pred_fallthru
          _
      $region16: #{tpu_custom_call.1} parent=5 // pred_fallthru
        _
      %p225 = scmp.le.s32.totalorder 1, %s14
      %p226 = scmp.lt.s32.totalorder %s14, 4
      %p227 = pnand %p225, %p226
      %p228 = pneg %p227
      // Predicated region
      $region37: #{tpu_custom_call.1} parent=5 // pred_check
        _
      $region38: #{tpu_custom_call.1} parent=5 // pred_check_branch
        %230 = sbr.rel (%p227) target = $region40
      $region39: #{tpu_custom_call.1} parent=5 // pred_region
        %s231 = ssub.s32 %s14, 1
        %p232 = scmp.lt.s32.totalorder %s19, 2
        %s233 = scalar_select %p232, %s19, 2
        %s234 = smul.addr %s233, 64
        %s235 = smul.addr %s234, 8
        %s236 = scalar_lea.vmem %s0, %s235
        %p237 = pneg %p40
        %p238 = pneg %p37
        %p239 = scmp.lt.s32.totalorder %s19, 2
        %s240 = scalar_select %p239, %s19, 2
        %s241 = smul.addr %s240, 9
        %s242 = smul.addr %s241, 8
        %s243 = scalar_lea.vmem %s1, %s242
        %p244 = pneg %p66
        %p245 = pneg %p63
        %p246 = scmp.lt.s32.totalorder %s19, 2
        %s247 = scalar_select %p246, %s19, 2
        %s248 = scalar_lea.vmem %s2, %s247
        %p249 = pneg %p92
        %p250 = pneg %p89
        %p251 = scmp.lt.s32.totalorder %s19, 2
        %s252 = scalar_select %p251, %s19, 2
        %s253 = smul.addr %s252, 4
        %s254 = smul.addr %s253, 8
        %s255 = scalar_lea.vmem %s3, %s254
        %p256 = pneg %p118
        %p257 = pneg %p115
        %p258 = scmp.lt.s32.totalorder %s19, 2
        %s259 = scalar_select %p258, %s19, 2
        %s260 = scalar_lea.vmem %s4, %s259
        %p261 = pneg %p144
        %p262 = pneg %p141
        %p263 = pneg %p170
        %p264 = pneg %p167
        %s265 = sand.u32 %s157, 1
        %s266 = scalar_lea.sflag [#allocation3], %s265
        %s267 = sand.u32 %s157, 1
        %s268 = smul.addr %s267, 32
        %s269 = scalar_lea.vmem [#allocation2], %s268
        %p270 = scmp.lt.s32.totalorder %s19, 2
        %s271 = scalar_select %p270, %s19, 2
        %s272 = smul.addr %s271, 64
        %s273 = smul.addr %s272, 8
        %s274 = scalar_lea.vmem %s0, %s273
        %p275 = scmp.lt.s32.totalorder %s19, 2
        %s276 = scalar_select %p275, %s19, 2
        %s277 = smul.addr %s276, 9
        %s278 = smul.addr %s277, 8
        %s279 = scalar_lea.vmem %s1, %s278
        %p280 = scmp.lt.s32.totalorder %s19, 2
        %s281 = scalar_select %p280, %s19, 2
        %s282 = scalar_lea.vmem %s2, %s281
        %p283 = scmp.lt.s32.totalorder %s19, 2
        %s284 = scalar_select %p283, %s19, 2
        %s285 = smul.addr %s284, 4
        %s286 = smul.addr %s285, 8
        %s287 = scalar_lea.vmem %s3, %s286
        %p288 = scmp.lt.s32.totalorder %s19, 2
        %s289 = scalar_select %p288, %s19, 2
        %s290 = scalar_lea.vmem %s4, %s289
        %v291 = vld [vmem:[%s274] sm:$0xff]
        %v292 = vld [vmem:[%s274 + $0x8] sm:$0xff]
        %v293 = vld [vmem:[%s274 + $0x10] sm:$0xff]
        %v294 = vld [vmem:[%s274 + $0x18] sm:$0xff]
        %v295 = vld [vmem:[%s274 + $0x20] sm:$0xff]
        %v296 = vld [vmem:[%s274 + $0x28] sm:$0xff]
        %v297 = vld [vmem:[%s274 + $0x30] sm:$0xff]
        %v298 = vld [vmem:[%s274 + $0x38] sm:$0xff]
        %v299 = vld [vmem:[%s274 + $0x40] sm:$0xff]
        %v300 = vld [vmem:[%s274 + $0x48] sm:$0xff]
        %v301 = vld [vmem:[%s274 + $0x50] sm:$0xff]
        %v302 = vld [vmem:[%s274 + $0x58] sm:$0xff]
        %v303 = vld [vmem:[%s274 + $0x60] sm:$0xff]
        %v304 = vld [vmem:[%s274 + $0x68] sm:$0xff]
        %v305 = vld [vmem:[%s274 + $0x70] sm:$0xff]
        %v306 = vld [vmem:[%s274 + $0x78] sm:$0xff]
        %v307 = vld [vmem:[%s274 + $0x80] sm:$0xff]
        %v308 = vld [vmem:[%s274 + $0x88] sm:$0xff]
        %v309 = vld [vmem:[%s274 + $0x90] sm:$0xff]
        %v310 = vld [vmem:[%s274 + $0x98] sm:$0xff]
        %v311 = vld [vmem:[%s274 + $0xa0] sm:$0xff]
        %v312 = vld [vmem:[%s274 + $0xa8] sm:$0xff]
        %v313 = vld [vmem:[%s274 + $0xb0] sm:$0xff]
        %v314 = vld [vmem:[%s274 + $0xb8] sm:$0xff]
        %v315 = vld [vmem:[%s274 + $0xc0] sm:$0xff]
        %v316 = vld [vmem:[%s274 + $0xc8] sm:$0xff]
        %v317 = vld [vmem:[%s274 + $0xd0] sm:$0xff]
        %v318 = vld [vmem:[%s274 + $0xd8] sm:$0xff]
        %v319 = vld [vmem:[%s274 + $0xe0] sm:$0xff]
        %v320 = vld [vmem:[%s274 + $0xe8] sm:$0xff]
        %v321 = vld [vmem:[%s274 + $0xf0] sm:$0xff]
        %v322 = vld [vmem:[%s274 + $0xf8] sm:$0xff]
        %v323 = vld [vmem:[%s274 + $0x100] sm:$0xff]
        %v324 = vld [vmem:[%s274 + $0x108] sm:$0xff]
        %v325 = vld [vmem:[%s274 + $0x110] sm:$0xff]
        %v326 = vld [vmem:[%s274 + $0x118] sm:$0xff]
        %v327 = vld [vmem:[%s274 + $0x120] sm:$0xff]
        %v328 = vld [vmem:[%s274 + $0x128] sm:$0xff]
        %v329 = vld [vmem:[%s274 + $0x130] sm:$0xff]
        %v330 = vld [vmem:[%s274 + $0x138] sm:$0xff]
        %v331 = vld [vmem:[%s274 + $0x140] sm:$0xff]
        %v332 = vld [vmem:[%s274 + $0x148] sm:$0xff]
        %v333 = vld [vmem:[%s274 + $0x150] sm:$0xff]
        %v334 = vld [vmem:[%s274 + $0x158] sm:$0xff]
        %v335 = vld [vmem:[%s274 + $0x160] sm:$0xff]
        %v336 = vld [vmem:[%s274 + $0x168] sm:$0xff]
        %v337 = vld [vmem:[%s274 + $0x170] sm:$0xff]
        %v338 = vld [vmem:[%s274 + $0x178] sm:$0xff]
        %v339 = vld [vmem:[%s274 + $0x180] sm:$0xff]
        %v340 = vld [vmem:[%s274 + $0x188] sm:$0xff]
        %v341 = vld [vmem:[%s274 + $0x190] sm:$0xff]
        %v342 = vld [vmem:[%s274 + $0x198] sm:$0xff]
        %v343 = vld [vmem:[%s274 + $0x1a0] sm:$0xff]
        %v344 = vld [vmem:[%s274 + $0x1a8] sm:$0xff]
        %v345 = vld [vmem:[%s274 + $0x1b0] sm:$0xff]
        %v346 = vld [vmem:[%s274 + $0x1b8] sm:$0xff]
        %v347 = vld [vmem:[%s274 + $0x1c0] sm:$0xff]
        %v348 = vld [vmem:[%s274 + $0x1c8] sm:$0xff]
        %v349 = vld [vmem:[%s274 + $0x1d0] sm:$0xff]
        %v350 = vld [vmem:[%s274 + $0x1d8] sm:$0xff]
        %v351 = vld [vmem:[%s274 + $0x1e0] sm:$0xff]
        %v352 = vld [vmem:[%s274 + $0x1e8] sm:$0xff]
        %v353 = vld [vmem:[%s274 + $0x1f0] sm:$0xff]
        %v354 = vld [vmem:[%s274 + $0x1f8] sm:$0xff]
        %v355 = vld [vmem:[%s279] sm:$0xff]
        %v356 = vld [vmem:[%s279 + $0x8] sm:$0xff]
        %v357 = vld [vmem:[%s279 + $0x10] sm:$0xff]
        %v358 = vld [vmem:[%s279 + $0x18] sm:$0xff]
        %v359 = vld [vmem:[%s279 + $0x20] sm:$0xff]
        %v360 = vld [vmem:[%s279 + $0x28] sm:$0xff]
        %v361 = vld [vmem:[%s279 + $0x30] sm:$0xff]
        %v362 = vld [vmem:[%s279 + $0x38] sm:$0xff]
        %v363 = vld [vmem:[%s279 + $0x40] sm:$0xff]
        %v364 = vld [vmem:[%s282] sm:$0x1]
        %v366 = vperm.slane %v364, 0
        %vm368 = vcmask 588800
        %v370 = vsel %vm368, %v291, 0
        %v373 = vsel %vm368, %v292, 0
        %v376 = vsel %vm368, %v293, 0
        %v379 = vsel %vm368, %v294, 0
        %v382 = vsel %vm368, %v295, 0
        %v385 = vsel %vm368, %v296, 0
        %v388 = vsel %vm368, %v297, 0
        %v391 = vsel %vm368, %v298, 0
        %v394 = vsel %vm368, %v299, 0
        %v397 = vsel %vm368, %v300, 0
        %v400 = vsel %vm368, %v301, 0
        %v403 = vsel %vm368, %v302, 0
        %v406 = vsel %vm368, %v303, 0
        %v409 = vsel %vm368, %v304, 0
        %v412 = vsel %vm368, %v305, 0
        %v415 = vsel %vm368, %v306, 0
        %v418 = vsel %vm368, %v307, 0
        %v421 = vsel %vm368, %v308, 0
        %v424 = vsel %vm368, %v309, 0
        %v427 = vsel %vm368, %v310, 0
        %v430 = vsel %vm368, %v311, 0
        %v433 = vsel %vm368, %v312, 0
        %v436 = vsel %vm368, %v313, 0
        %v439 = vsel %vm368, %v314, 0
        %v442 = vsel %vm368, %v315, 0
        %v445 = vsel %vm368, %v316, 0
        %v448 = vsel %vm368, %v317, 0
        %v451 = vsel %vm368, %v318, 0
        %v454 = vsel %vm368, %v319, 0
        %v457 = vsel %vm368, %v320, 0
        %v460 = vsel %vm368, %v321, 0
        %v463 = vsel %vm368, %v322, 0
        %v466 = vsel %vm368, %v323, 0
        %v469 = vsel %vm368, %v324, 0
        %v472 = vsel %vm368, %v325, 0
        %v475 = vsel %vm368, %v326, 0
        %v478 = vsel %vm368, %v327, 0
        %v481 = vsel %vm368, %v328, 0
        %v484 = vsel %vm368, %v329, 0
        %v487 = vsel %vm368, %v330, 0
        %v490 = vsel %vm368, %v331, 0
        %v493 = vsel %vm368, %v332, 0
        %v496 = vsel %vm368, %v333, 0
        %v499 = vsel %vm368, %v334, 0
        %v502 = vsel %vm368, %v335, 0
        %v505 = vsel %vm368, %v336, 0
        %v508 = vsel %vm368, %v337, 0
        %v511 = vsel %vm368, %v338, 0
        %v514 = vsel %vm368, %v339, 0
        %v517 = vsel %vm368, %v340, 0
        %v520 = vsel %vm368, %v341, 0
        %v523 = vsel %vm368, %v342, 0
        %v526 = vsel %vm368, %v343, 0
        %v529 = vsel %vm368, %v344, 0
        %v532 = vsel %vm368, %v345, 0
        %v535 = vsel %vm368, %v346, 0
        %v538 = vsel %vm368, %v347, 0
        %v541 = vsel %vm368, %v348, 0
        %v544 = vsel %vm368, %v349, 0
        %v547 = vsel %vm368, %v350, 0
        %v550 = vsel %vm368, %v351, 0
        %v553 = vsel %vm368, %v352, 0
        %v556 = vsel %vm368, %v353, 0
        %v559 = vsel %vm368, %v354, 0
        %561 = vmatpush.msra.mxu0 0.0
        %562 = vmatpush.msra.mxu0 0.0
        %563 = vmatpush.msra.mxu0 0.0
        %564 = vmatpush.msra.mxu0 0.0
        %565 = vmatpush.msra.mxu0 0.0
        %566 = vmatpush.msra.mxu0 0.0
        %567 = vmatpush.msra.mxu0 0.0
        %568 = vmatpush.msra.mxu0 %v363
        %569 = vmatpush.msra.mxu0 %v362
        %570 = vmatpush.msra.mxu0 %v361
        %571 = vmatpush.msra.mxu0 %v360
        %572 = vmatpush.msra.mxu0 %v359
        %573 = vmatpush.msra.mxu0 %v358
        %574 = vmatpush.msra.mxu0 %v357
        %575 = vmatpush.msra.mxu0 %v356
        %576 = vmatpush.msra.mxu0 %v355
        %577 = vmatmul.f32.gmra.mxu0 %v370
        %v578 = vpop.f32.mrf.mxu0
        %v579 = vadd.f32 %v366, %v578
        %580 = vmatmul.f32.gmra.mxu0 %v373
        %v581 = vpop.f32.mrf.mxu0
        %v582 = vadd.f32 %v366, %v581
        %583 = vmatmul.f32.gmra.mxu0 %v376
        %v584 = vpop.f32.mrf.mxu0
        %v585 = vadd.f32 %v366, %v584
        %586 = vmatmul.f32.gmra.mxu0 %v379
        %v587 = vpop.f32.mrf.mxu0
        %v588 = vadd.f32 %v366, %v587
        %589 = vmatmul.f32.gmra.mxu0 %v382
        %v590 = vpop.f32.mrf.mxu0
        %v591 = vadd.f32 %v366, %v590
        %592 = vmatmul.f32.gmra.mxu0 %v385
        %v593 = vpop.f32.mrf.mxu0
        %v594 = vadd.f32 %v366, %v593
        %595 = vmatmul.f32.gmra.mxu0 %v388
        %v596 = vpop.f32.mrf.mxu0
        %v597 = vadd.f32 %v366, %v596
        %598 = vmatmul.f32.gmra.mxu0 %v391
        %v599 = vpop.f32.mrf.mxu0
        %v600 = vadd.f32 %v366, %v599
        %601 = vmatmul.f32.gmra.mxu0 %v394
        %v602 = vpop.f32.mrf.mxu0
        %v603 = vadd.f32 %v366, %v602
        %604 = vmatmul.f32.gmra.mxu0 %v397
        %v605 = vpop.f32.mrf.mxu0
        %v606 = vadd.f32 %v366, %v605
        %607 = vmatmul.f32.gmra.mxu0 %v400
        %v608 = vpop.f32.mrf.mxu0
        %v609 = vadd.f32 %v366, %v608
        %610 = vmatmul.f32.gmra.mxu0 %v403
        %v611 = vpop.f32.mrf.mxu0
        %v612 = vadd.f32 %v366, %v611
        %613 = vmatmul.f32.gmra.mxu0 %v406
        %v614 = vpop.f32.mrf.mxu0
        %v615 = vadd.f32 %v366, %v614
        %616 = vmatmul.f32.gmra.mxu0 %v409
        %v617 = vpop.f32.mrf.mxu0
        %v618 = vadd.f32 %v366, %v617
        %619 = vmatmul.f32.gmra.mxu0 %v412
        %v620 = vpop.f32.mrf.mxu0
        %v621 = vadd.f32 %v366, %v620
        %622 = vmatmul.f32.gmra.mxu0 %v415
        %v623 = vpop.f32.mrf.mxu0
        %v624 = vadd.f32 %v366, %v623
        %625 = vmatmul.f32.gmra.mxu0 %v418
        %v626 = vpop.f32.mrf.mxu0
        %v627 = vadd.f32 %v366, %v626
        %628 = vmatmul.f32.gmra.mxu0 %v421
        %v629 = vpop.f32.mrf.mxu0
        %v630 = vadd.f32 %v366, %v629
        %631 = vmatmul.f32.gmra.mxu0 %v424
        %v632 = vpop.f32.mrf.mxu0
        %v633 = vadd.f32 %v366, %v632
        %634 = vmatmul.f32.gmra.mxu0 %v427
        %v635 = vpop.f32.mrf.mxu0
        %v636 = vadd.f32 %v366, %v635
        %637 = vmatmul.f32.gmra.mxu0 %v430
        %v638 = vpop.f32.mrf.mxu0
        %v639 = vadd.f32 %v366, %v638
        %640 = vmatmul.f32.gmra.mxu0 %v433
        %v641 = vpop.f32.mrf.mxu0
        %v642 = vadd.f32 %v366, %v641
        %643 = vmatmul.f32.gmra.mxu0 %v436
        %v644 = vpop.f32.mrf.mxu0
        %v645 = vadd.f32 %v366, %v644
        %646 = vmatmul.f32.gmra.mxu0 %v439
        %v647 = vpop.f32.mrf.mxu0
        %v648 = vadd.f32 %v366, %v647
        %649 = vmatmul.f32.gmra.mxu0 %v442
        %v650 = vpop.f32.mrf.mxu0
        %v651 = vadd.f32 %v366, %v650
        %652 = vmatmul.f32.gmra.mxu0 %v445
        %v653 = vpop.f32.mrf.mxu0
        %v654 = vadd.f32 %v366, %v653
        %655 = vmatmul.f32.gmra.mxu0 %v448
        %v656 = vpop.f32.mrf.mxu0
        %v657 = vadd.f32 %v366, %v656
        %658 = vmatmul.f32.gmra.mxu0 %v451
        %v659 = vpop.f32.mrf.mxu0
        %v660 = vadd.f32 %v366, %v659
        %661 = vmatmul.f32.gmra.mxu0 %v454
        %v662 = vpop.f32.mrf.mxu0
        %v663 = vadd.f32 %v366, %v662
        %664 = vmatmul.f32.gmra.mxu0 %v457
        %v665 = vpop.f32.mrf.mxu0
        %v666 = vadd.f32 %v366, %v665
        %667 = vmatmul.f32.gmra.mxu0 %v460
        %v668 = vpop.f32.mrf.mxu0
        %v669 = vadd.f32 %v366, %v668
        %670 = vmatmul.f32.gmra.mxu0 %v463
        %v671 = vpop.f32.mrf.mxu0
        %v672 = vadd.f32 %v366, %v671
        %673 = vmatmul.f32.gmra.mxu0 %v466
        %v674 = vpop.f32.mrf.mxu0
        %v675 = vadd.f32 %v366, %v674
        %676 = vmatmul.f32.gmra.mxu0 %v469
        %v677 = vpop.f32.mrf.mxu0
        %v678 = vadd.f32 %v366, %v677
        %679 = vmatmul.f32.gmra.mxu0 %v472
        %v680 = vpop.f32.mrf.mxu0
        %v681 = vadd.f32 %v366, %v680
        %682 = vmatmul.f32.gmra.mxu0 %v475
        %v683 = vpop.f32.mrf.mxu0
        %v684 = vadd.f32 %v366, %v683
        %685 = vmatmul.f32.gmra.mxu0 %v478
        %v686 = vpop.f32.mrf.mxu0
        %v687 = vadd.f32 %v366, %v686
        %688 = vmatmul.f32.gmra.mxu0 %v481
        %v689 = vpop.f32.mrf.mxu0
        %v690 = vadd.f32 %v366, %v689
        %691 = vmatmul.f32.gmra.mxu0 %v484
        %v692 = vpop.f32.mrf.mxu0
        %v693 = vadd.f32 %v366, %v692
        %694 = vmatmul.f32.gmra.mxu0 %v487
        %v695 = vpop.f32.mrf.mxu0
        %v696 = vadd.f32 %v366, %v695
        %697 = vmatmul.f32.gmra.mxu0 %v490
        %v698 = vpop.f32.mrf.mxu0
        %v699 = vadd.f32 %v366, %v698
        %700 = vmatmul.f32.gmra.mxu0 %v493
        %v701 = vpop.f32.mrf.mxu0
        %v702 = vadd.f32 %v366, %v701
        %703 = vmatmul.f32.gmra.mxu0 %v496
        %v704 = vpop.f32.mrf.mxu0
        %v705 = vadd.f32 %v366, %v704
        %706 = vmatmul.f32.gmra.mxu0 %v499
        %v707 = vpop.f32.mrf.mxu0
        %v708 = vadd.f32 %v366, %v707
        %709 = vmatmul.f32.gmra.mxu0 %v502
        %v710 = vpop.f32.mrf.mxu0
        %v711 = vadd.f32 %v366, %v710
        %712 = vmatmul.f32.gmra.mxu0 %v505
        %v713 = vpop.f32.mrf.mxu0
        %v714 = vadd.f32 %v366, %v713
        %715 = vmatmul.f32.gmra.mxu0 %v508
        %v716 = vpop.f32.mrf.mxu0
        %v717 = vadd.f32 %v366, %v716
        %718 = vmatmul.f32.gmra.mxu0 %v511
        %v719 = vpop.f32.mrf.mxu0
        %v720 = vadd.f32 %v366, %v719
        %721 = vmatmul.f32.gmra.mxu0 %v514
        %v722 = vpop.f32.mrf.mxu0
        %v723 = vadd.f32 %v366, %v722
        %724 = vmatmul.f32.gmra.mxu0 %v517
        %v725 = vpop.f32.mrf.mxu0
        %v726 = vadd.f32 %v366, %v725
        %727 = vmatmul.f32.gmra.mxu0 %v520
        %v728 = vpop.f32.mrf.mxu0
        %v729 = vadd.f32 %v366, %v728
        %730 = vmatmul.f32.gmra.mxu0 %v523
        %v731 = vpop.f32.mrf.mxu0
        %v732 = vadd.f32 %v366, %v731
        %733 = vmatmul.f32.gmra.mxu0 %v526
        %v734 = vpop.f32.mrf.mxu0
        %v735 = vadd.f32 %v366, %v734
        %736 = vmatmul.f32.gmra.mxu0 %v529
        %v737 = vpop.f32.mrf.mxu0
        %v738 = vadd.f32 %v366, %v737
        %739 = vmatmul.f32.gmra.mxu0 %v532
        %v740 = vpop.f32.mrf.mxu0
        %v741 = vadd.f32 %v366, %v740
        %742 = vmatmul.f32.gmra.mxu0 %v535
        %v743 = vpop.f32.mrf.mxu0
        %v744 = vadd.f32 %v366, %v743
        %745 = vmatmul.f32.gmra.mxu0 %v538
        %v746 = vpop.f32.mrf.mxu0
        %v747 = vadd.f32 %v366, %v746
        %748 = vmatmul.f32.gmra.mxu0 %v541
        %v749 = vpop.f32.mrf.mxu0
        %v750 = vadd.f32 %v366, %v749
        %751 = vmatmul.f32.gmra.mxu0 %v544
        %v752 = vpop.f32.mrf.mxu0
        %v753 = vadd.f32 %v366, %v752
        %754 = vmatmul.f32.gmra.mxu0 %v547
        %v755 = vpop.f32.mrf.mxu0
        %v756 = vadd.f32 %v366, %v755
        %757 = vmatmul.f32.gmra.mxu0 %v550
        %v758 = vpop.f32.mrf.mxu0
        %v759 = vadd.f32 %v366, %v758
        %760 = vmatmul.f32.gmra.mxu0 %v553
        %v761 = vpop.f32.mrf.mxu0
        %v762 = vadd.f32 %v366, %v761
        %763 = vmatmul.f32.gmra.mxu0 %v556
        %v764 = vpop.f32.mrf.mxu0
        %v765 = vadd.f32 %v366, %v764
        %766 = vmatmul.f32.gmra.mxu0 %v559
        %v767 = vpop.f32.mrf.mxu0
        %v768 = vadd.f32 %v366, %v767
        %769 = vdwg.mxu0
        %v770 = vmax.f32 %v579, 0.0
        %v771 = vmax.f32 %v582, 0.0
        %v772 = vmax.f32 %v585, 0.0
        %v773 = vmax.f32 %v588, 0.0
        %v774 = vmax.f32 %v591, 0.0
        %v775 = vmax.f32 %v594, 0.0
        %v776 = vmax.f32 %v597, 0.0
        %v777 = vmax.f32 %v600, 0.0
        %v778 = vmax.f32 %v603, 0.0
        %v779 = vmax.f32 %v606, 0.0
        %v780 = vmax.f32 %v609, 0.0
        %v781 = vmax.f32 %v612, 0.0
        %v782 = vmax.f32 %v615, 0.0
        %v783 = vmax.f32 %v618, 0.0
        %v784 = vmax.f32 %v621, 0.0
        %v785 = vmax.f32 %v624, 0.0
        %v786 = vmax.f32 %v627, 0.0
        %v787 = vmax.f32 %v630, 0.0
        %v788 = vmax.f32 %v633, 0.0
        %v789 = vmax.f32 %v636, 0.0
        %v790 = vmax.f32 %v639, 0.0
        %v791 = vmax.f32 %v642, 0.0
        %v792 = vmax.f32 %v645, 0.0
        %v793 = vmax.f32 %v648, 0.0
        %v794 = vmax.f32 %v651, 0.0
        %v795 = vmax.f32 %v654, 0.0
        %v796 = vmax.f32 %v657, 0.0
        %v797 = vmax.f32 %v660, 0.0
        %v798 = vmax.f32 %v663, 0.0
        %v799 = vmax.f32 %v666, 0.0
        %v800 = vmax.f32 %v669, 0.0
        %v801 = vmax.f32 %v672, 0.0
        %v802 = vmax.f32 %v675, 0.0
        %v803 = vmax.f32 %v678, 0.0
        %v804 = vmax.f32 %v681, 0.0
        %v805 = vmax.f32 %v684, 0.0
        %v806 = vmax.f32 %v687, 0.0
        %v807 = vmax.f32 %v690, 0.0
        %v808 = vmax.f32 %v693, 0.0
        %v809 = vmax.f32 %v696, 0.0
        %v810 = vmax.f32 %v699, 0.0
        %v811 = vmax.f32 %v702, 0.0
        %v812 = vmax.f32 %v705, 0.0
        %v813 = vmax.f32 %v708, 0.0
        %v814 = vmax.f32 %v711, 0.0
        %v815 = vmax.f32 %v714, 0.0
        %v816 = vmax.f32 %v717, 0.0
        %v817 = vmax.f32 %v720, 0.0
        %v818 = vmax.f32 %v723, 0.0
        %v819 = vmax.f32 %v726, 0.0
        %v820 = vmax.f32 %v729, 0.0
        %v821 = vmax.f32 %v732, 0.0
        %v822 = vmax.f32 %v735, 0.0
        %v823 = vmax.f32 %v738, 0.0
        %v824 = vmax.f32 %v741, 0.0
        %v825 = vmax.f32 %v744, 0.0
        %v826 = vmax.f32 %v747, 0.0
        %v827 = vmax.f32 %v750, 0.0
        %v828 = vmax.f32 %v753, 0.0
        %v829 = vmax.f32 %v756, 0.0
        %v830 = vmax.f32 %v759, 0.0
        %v831 = vmax.f32 %v762, 0.0
        %v832 = vmax.f32 %v765, 0.0
        %v833 = vmax.f32 %v768, 0.0
        %v834 = vld [vmem:[%s287] sm:$0xff]
        %v835 = vld [vmem:[%s287 + $0x8] sm:$0xff]
        %v836 = vld [vmem:[%s287 + $0x10] sm:$0xff]
        %v837 = vld [vmem:[%s287 + $0x18] sm:$0xff]
        %v838 = vld [vmem:[%s290] sm:$0x1]
        %v840 = vperm.slane %v838, 0
        %vm842 = vcmask 261120
        %v844 = vsel %vm842, %v770, 0
        %v847 = vsel %vm842, %v771, 0
        %v850 = vsel %vm842, %v772, 0
        %v853 = vsel %vm842, %v773, 0
        %v856 = vsel %vm842, %v774, 0
        %v859 = vsel %vm842, %v775, 0
        %v862 = vsel %vm842, %v776, 0
        %v865 = vsel %vm842, %v777, 0
        %v868 = vsel %vm842, %v778, 0
        %v871 = vsel %vm842, %v779, 0
        %v874 = vsel %vm842, %v780, 0
        %v877 = vsel %vm842, %v781, 0
        %v880 = vsel %vm842, %v782, 0
        %v883 = vsel %vm842, %v783, 0
        %v886 = vsel %vm842, %v784, 0
        %v889 = vsel %vm842, %v785, 0
        %v892 = vsel %vm842, %v786, 0
        %v895 = vsel %vm842, %v787, 0
        %v898 = vsel %vm842, %v788, 0
        %v901 = vsel %vm842, %v789, 0
        %v904 = vsel %vm842, %v790, 0
        %v907 = vsel %vm842, %v791, 0
        %v910 = vsel %vm842, %v792, 0
        %v913 = vsel %vm842, %v793, 0
        %v916 = vsel %vm842, %v794, 0
        %v919 = vsel %vm842, %v795, 0
        %v922 = vsel %vm842, %v796, 0
        %v925 = vsel %vm842, %v797, 0
        %v928 = vsel %vm842, %v798, 0
        %v931 = vsel %vm842, %v799, 0
        %v934 = vsel %vm842, %v800, 0
        %v937 = vsel %vm842, %v801, 0
        %v940 = vsel %vm842, %v802, 0
        %v943 = vsel %vm842, %v803, 0
        %v946 = vsel %vm842, %v804, 0
        %v949 = vsel %vm842, %v805, 0
        %v952 = vsel %vm842, %v806, 0
        %v955 = vsel %vm842, %v807, 0
        %v958 = vsel %vm842, %v808, 0
        %v961 = vsel %vm842, %v809, 0
        %v964 = vsel %vm842, %v810, 0
        %v967 = vsel %vm842, %v811, 0
        %v970 = vsel %vm842, %v812, 0
        %v973 = vsel %vm842, %v813, 0
        %v976 = vsel %vm842, %v814, 0
        %v979 = vsel %vm842, %v815, 0
        %v982 = vsel %vm842, %v816, 0
        %v985 = vsel %vm842, %v817, 0
        %v988 = vsel %vm842, %v818, 0
        %v991 = vsel %vm842, %v819, 0
        %v994 = vsel %vm842, %v820, 0
        %v997 = vsel %vm842, %v821, 0
        %v1000 = vsel %vm842, %v822, 0
        %v1003 = vsel %vm842, %v823, 0
        %v1006 = vsel %vm842, %v824, 0
        %v1009 = vsel %vm842, %v825, 0
        %v1012 = vsel %vm842, %v826, 0
        %v1015 = vsel %vm842, %v827, 0
        %v1018 = vsel %vm842, %v828, 0
        %v1021 = vsel %vm842, %v829, 0
        %v1024 = vsel %vm842, %v830, 0
        %v1027 = vsel %vm842, %v831, 0
        %v1030 = vsel %vm842, %v832, 0
        %v1033 = vsel %vm842, %v833, 0
        %1035 = vmatpush.msra.mxu0 0.0
        %1036 = vmatpush.msra.mxu0 0.0
        %1037 = vmatpush.msra.mxu0 0.0
        %1038 = vmatpush.msra.mxu0 0.0
        %1039 = vmatpush.msra.mxu0 0.0
        %1040 = vmatpush.msra.mxu0 0.0
        %1041 = vmatpush.msra.mxu0 0.0
        %1042 = vmatpush.msra.mxu0 0.0
        %1043 = vmatpush.msra.mxu0 0.0
        %1044 = vmatpush.msra.mxu0 0.0
        %1045 = vmatpush.msra.mxu0 0.0
        %1046 = vmatpush.msra.mxu0 0.0
        %1047 = vmatpush.msra.mxu0 %v837
        %1048 = vmatpush.msra.mxu0 %v836
        %1049 = vmatpush.msra.mxu0 %v835
        %1050 = vmatpush.msra.mxu0 %v834
        %1051 = vmatmul.f32.gmra.mxu0 %v844
        %v1052 = vpop.f32.mrf.mxu0
        %v1053 = vadd.f32 %v840, %v1052
        %1054 = vmatmul.f32.gmra.mxu0 %v847
        %v1055 = vpop.f32.mrf.mxu0
        %v1056 = vadd.f32 %v840, %v1055
        %1057 = vmatmul.f32.gmra.mxu0 %v850
        %v1058 = vpop.f32.mrf.mxu0
        %v1059 = vadd.f32 %v840, %v1058
        %1060 = vmatmul.f32.gmra.mxu0 %v853
        %v1061 = vpop.f32.mrf.mxu0
        %v1062 = vadd.f32 %v840, %v1061
        %1063 = vmatmul.f32.gmra.mxu0 %v856
        %v1064 = vpop.f32.mrf.mxu0
        %v1065 = vadd.f32 %v840, %v1064
        %1066 = vmatmul.f32.gmra.mxu0 %v859
        %v1067 = vpop.f32.mrf.mxu0
        %v1068 = vadd.f32 %v840, %v1067
        %1069 = vmatmul.f32.gmra.mxu0 %v862
        %v1070 = vpop.f32.mrf.mxu0
        %v1071 = vadd.f32 %v840, %v1070
        %1072 = vmatmul.f32.gmra.mxu0 %v865
        %v1073 = vpop.f32.mrf.mxu0
        %v1074 = vadd.f32 %v840, %v1073
        %1075 = vmatmul.f32.gmra.mxu0 %v868
        %v1076 = vpop.f32.mrf.mxu0
        %v1077 = vadd.f32 %v840, %v1076
        %1078 = vmatmul.f32.gmra.mxu0 %v871
        %v1079 = vpop.f32.mrf.mxu0
        %v1080 = vadd.f32 %v840, %v1079
        %1081 = vmatmul.f32.gmra.mxu0 %v874
        %v1082 = vpop.f32.mrf.mxu0
        %v1083 = vadd.f32 %v840, %v1082
        %1084 = vmatmul.f32.gmra.mxu0 %v877
        %v1085 = vpop.f32.mrf.mxu0
        %v1086 = vadd.f32 %v840, %v1085
        %1087 = vmatmul.f32.gmra.mxu0 %v880
        %v1088 = vpop.f32.mrf.mxu0
        %v1089 = vadd.f32 %v840, %v1088
        %1090 = vmatmul.f32.gmra.mxu0 %v883
        %v1091 = vpop.f32.mrf.mxu0
        %v1092 = vadd.f32 %v840, %v1091
        %1093 = vmatmul.f32.gmra.mxu0 %v886
        %v1094 = vpop.f32.mrf.mxu0
        %v1095 = vadd.f32 %v840, %v1094
        %1096 = vmatmul.f32.gmra.mxu0 %v889
        %v1097 = vpop.f32.mrf.mxu0
        %v1098 = vadd.f32 %v840, %v1097
        %1099 = vmatmul.f32.gmra.mxu0 %v892
        %v1100 = vpop.f32.mrf.mxu0
        %v1101 = vadd.f32 %v840, %v1100
        %1102 = vmatmul.f32.gmra.mxu0 %v895
        %v1103 = vpop.f32.mrf.mxu0
        %v1104 = vadd.f32 %v840, %v1103
        %1105 = vmatmul.f32.gmra.mxu0 %v898
        %v1106 = vpop.f32.mrf.mxu0
        %v1107 = vadd.f32 %v840, %v1106
        %1108 = vmatmul.f32.gmra.mxu0 %v901
        %v1109 = vpop.f32.mrf.mxu0
        %v1110 = vadd.f32 %v840, %v1109
        %1111 = vmatmul.f32.gmra.mxu0 %v904
        %v1112 = vpop.f32.mrf.mxu0
        %v1113 = vadd.f32 %v840, %v1112
        %1114 = vmatmul.f32.gmra.mxu0 %v907
        %v1115 = vpop.f32.mrf.mxu0
        %v1116 = vadd.f32 %v840, %v1115
        %1117 = vmatmul.f32.gmra.mxu0 %v910
        %v1118 = vpop.f32.mrf.mxu0
        %v1119 = vadd.f32 %v840, %v1118
        %1120 = vmatmul.f32.gmra.mxu0 %v913
        %v1121 = vpop.f32.mrf.mxu0
        %v1122 = vadd.f32 %v840, %v1121
        %1123 = vmatmul.f32.gmra.mxu0 %v916
        %v1124 = vpop.f32.mrf.mxu0
        %v1125 = vadd.f32 %v840, %v1124
        %1126 = vmatmul.f32.gmra.mxu0 %v919
        %v1127 = vpop.f32.mrf.mxu0
        %v1128 = vadd.f32 %v840, %v1127
        %1129 = vmatmul.f32.gmra.mxu0 %v922
        %v1130 = vpop.f32.mrf.mxu0
        %v1131 = vadd.f32 %v840, %v1130
        %1132 = vmatmul.f32.gmra.mxu0 %v925
        %v1133 = vpop.f32.mrf.mxu0
        %v1134 = vadd.f32 %v840, %v1133
        %1135 = vmatmul.f32.gmra.mxu0 %v928
        %v1136 = vpop.f32.mrf.mxu0
        %v1137 = vadd.f32 %v840, %v1136
        %1138 = vmatmul.f32.gmra.mxu0 %v931
        %v1139 = vpop.f32.mrf.mxu0
        %v1140 = vadd.f32 %v840, %v1139
        %1141 = vmatmul.f32.gmra.mxu0 %v934
        %v1142 = vpop.f32.mrf.mxu0
        %v1143 = vadd.f32 %v840, %v1142
        %1144 = vmatmul.f32.gmra.mxu0 %v937
        %v1145 = vpop.f32.mrf.mxu0
        %v1146 = vadd.f32 %v840, %v1145
        %1147 = vmatmul.f32.gmra.mxu0 %v940
        %v1148 = vpop.f32.mrf.mxu0
        %v1149 = vadd.f32 %v840, %v1148
        %1150 = vmatmul.f32.gmra.mxu0 %v943
        %v1151 = vpop.f32.mrf.mxu0
        %v1152 = vadd.f32 %v840, %v1151
        %1153 = vmatmul.f32.gmra.mxu0 %v946
        %v1154 = vpop.f32.mrf.mxu0
        %v1155 = vadd.f32 %v840, %v1154
        %1156 = vmatmul.f32.gmra.mxu0 %v949
        %v1157 = vpop.f32.mrf.mxu0
        %v1158 = vadd.f32 %v840, %v1157
        %1159 = vmatmul.f32.gmra.mxu0 %v952
        %v1160 = vpop.f32.mrf.mxu0
        %v1161 = vadd.f32 %v840, %v1160
        %1162 = vmatmul.f32.gmra.mxu0 %v955
        %v1163 = vpop.f32.mrf.mxu0
        %v1164 = vadd.f32 %v840, %v1163
        %1165 = vmatmul.f32.gmra.mxu0 %v958
        %v1166 = vpop.f32.mrf.mxu0
        %v1167 = vadd.f32 %v840, %v1166
        %1168 = vmatmul.f32.gmra.mxu0 %v961
        %v1169 = vpop.f32.mrf.mxu0
        %v1170 = vadd.f32 %v840, %v1169
        %1171 = vmatmul.f32.gmra.mxu0 %v964
        %v1172 = vpop.f32.mrf.mxu0
        %v1173 = vadd.f32 %v840, %v1172
        %1174 = vmatmul.f32.gmra.mxu0 %v967
        %v1175 = vpop.f32.mrf.mxu0
        %v1176 = vadd.f32 %v840, %v1175
        %1177 = vmatmul.f32.gmra.mxu0 %v970
        %v1178 = vpop.f32.mrf.mxu0
        %v1179 = vadd.f32 %v840, %v1178
        %1180 = vmatmul.f32.gmra.mxu0 %v973
        %v1181 = vpop.f32.mrf.mxu0
        %v1182 = vadd.f32 %v840, %v1181
        %1183 = vmatmul.f32.gmra.mxu0 %v976
        %v1184 = vpop.f32.mrf.mxu0
        %v1185 = vadd.f32 %v840, %v1184
        %1186 = vmatmul.f32.gmra.mxu0 %v979
        %v1187 = vpop.f32.mrf.mxu0
        %v1188 = vadd.f32 %v840, %v1187
        %1189 = vmatmul.f32.gmra.mxu0 %v982
        %v1190 = vpop.f32.mrf.mxu0
        %v1191 = vadd.f32 %v840, %v1190
        %1192 = vmatmul.f32.gmra.mxu0 %v985
        %v1193 = vpop.f32.mrf.mxu0
        %v1194 = vadd.f32 %v840, %v1193
        %1195 = vmatmul.f32.gmra.mxu0 %v988
        %v1196 = vpop.f32.mrf.mxu0
        %v1197 = vadd.f32 %v840, %v1196
        %1198 = vmatmul.f32.gmra.mxu0 %v991
        %v1199 = vpop.f32.mrf.mxu0
        %v1200 = vadd.f32 %v840, %v1199
        %1201 = vmatmul.f32.gmra.mxu0 %v994
        %v1202 = vpop.f32.mrf.mxu0
        %v1203 = vadd.f32 %v840, %v1202
        %1204 = vmatmul.f32.gmra.mxu0 %v997
        %v1205 = vpop.f32.mrf.mxu0
        %v1206 = vadd.f32 %v840, %v1205
        %1207 = vmatmul.f32.gmra.mxu0 %v1000
        %v1208 = vpop.f32.mrf.mxu0
        %v1209 = vadd.f32 %v840, %v1208
        %1210 = vmatmul.f32.gmra.mxu0 %v1003
        %v1211 = vpop.f32.mrf.mxu0
        %v1212 = vadd.f32 %v840, %v1211
        %1213 = vmatmul.f32.gmra.mxu0 %v1006
        %v1214 = vpop.f32.mrf.mxu0
        %v1215 = vadd.f32 %v840, %v1214
        %1216 = vmatmul.f32.gmra.mxu0 %v1009
        %v1217 = vpop.f32.mrf.mxu0
        %v1218 = vadd.f32 %v840, %v1217
        %1219 = vmatmul.f32.gmra.mxu0 %v1012
        %v1220 = vpop.f32.mrf.mxu0
        %v1221 = vadd.f32 %v840, %v1220
        %1222 = vmatmul.f32.gmra.mxu0 %v1015
        %v1223 = vpop.f32.mrf.mxu0
        %v1224 = vadd.f32 %v840, %v1223
        %1225 = vmatmul.f32.gmra.mxu0 %v1018
        %v1226 = vpop.f32.mrf.mxu0
        %v1227 = vadd.f32 %v840, %v1226
        %1228 = vmatmul.f32.gmra.mxu0 %v1021
        %v1229 = vpop.f32.mrf.mxu0
        %v1230 = vadd.f32 %v840, %v1229
        %1231 = vmatmul.f32.gmra.mxu0 %v1024
        %v1232 = vpop.f32.mrf.mxu0
        %v1233 = vadd.f32 %v840, %v1232
        %1234 = vmatmul.f32.gmra.mxu0 %v1027
        %v1235 = vpop.f32.mrf.mxu0
        %v1236 = vadd.f32 %v840, %v1235
        %1237 = vmatmul.f32.gmra.mxu0 %v1030
        %v1238 = vpop.f32.mrf.mxu0
        %v1239 = vadd.f32 %v840, %v1238
        %1240 = vmatmul.f32.gmra.mxu0 %v1033
        %v1241 = vpop.f32.mrf.mxu0
        %v1242 = vadd.f32 %v840, %v1241
        %1243 = vdwg.mxu0
        %1244 = vxpose.xlu0.b32.start [1/16] %v1053, 128
        %1245 = vxpose.xlu0.b32.cont [2/16] %v1056, 128
        %1246 = vxpose.xlu0.b32.cont [3/16] %v1059, 128
        %1247 = vxpose.xlu0.b32.cont [4/16] %v1062, 128
        %1248 = vxpose.xlu0.b32.cont [5/16] %v1065, 128
        %1249 = vxpose.xlu0.b32.cont [6/16] %v1068, 128
        %1250 = vxpose.xlu0.b32.cont [7/16] %v1071, 128
        %1251 = vxpose.xlu0.b32.cont [8/16] %v1074, 128
        %1252 = vxpose.xlu0.b32.cont [9/16] %v1077, 128
        %1253 = vxpose.xlu0.b32.cont [10/16] %v1080, 128
        %1254 = vxpose.xlu0.b32.cont [11/16] %v1083, 128
        %1255 = vxpose.xlu0.b32.cont [12/16] %v1086, 128
        %1256 = vxpose.xlu0.b32.cont [13/16] %v1089, 128
        %1257 = vxpose.xlu0.b32.cont [14/16] %v1092, 128
        %1258 = vxpose.xlu0.b32.cont [15/16] %v1095, 128
        %1259 = vxpose.xlu0.b32.end [16/16] %v1098, 128
        %v1260 = vpop.trf.xlu0
        %v1261 = vpop.trf.xlu0
        %v1262 = vpop.trf.xlu0
        %v1263 = vpop.trf.xlu0
        %v1264 = vpop.trf.xlu0
        %v1265 = vpop.trf.xlu0
        %v1266 = vpop.trf.xlu0
        %v1267 = vpop.trf.xlu0
        %v1268 = vpop.trf.xlu0
        %v1269 = vpop.trf.xlu0
        %v1270 = vpop.trf.xlu0
        %v1271 = vpop.trf.xlu0
        %v1272 = vpop.trf.xlu0
        %v1273 = vpop.trf.xlu0
        %v1274 = vpop.trf.xlu0
        %v1275 = vpop.trf.xlu0
        %1276 = vxpose.xlu0.b32.start [1/16] %v1101, 128
        %1277 = vxpose.xlu0.b32.cont [2/16] %v1104, 128
        %1278 = vxpose.xlu0.b32.cont [3/16] %v1107, 128
        %1279 = vxpose.xlu0.b32.cont [4/16] %v1110, 128
        %1280 = vxpose.xlu0.b32.cont [5/16] %v1113, 128
        %1281 = vxpose.xlu0.b32.cont [6/16] %v1116, 128
        %1282 = vxpose.xlu0.b32.cont [7/16] %v1119, 128
        %1283 = vxpose.xlu0.b32.cont [8/16] %v1122, 128
        %1284 = vxpose.xlu0.b32.cont [9/16] %v1125, 128
        %1285 = vxpose.xlu0.b32.cont [10/16] %v1128, 128
        %1286 = vxpose.xlu0.b32.cont [11/16] %v1131, 128
        %1287 = vxpose.xlu0.b32.cont [12/16] %v1134, 128
        %1288 = vxpose.xlu0.b32.cont [13/16] %v1137, 128
        %1289 = vxpose.xlu0.b32.cont [14/16] %v1140, 128
        %1290 = vxpose.xlu0.b32.cont [15/16] %v1143, 128
        %1291 = vxpose.xlu0.b32.end [16/16] %v1146, 128
        %v1292 = vpop.trf.xlu0
        %v1293 = vpop.trf.xlu0
        %v1294 = vpop.trf.xlu0
        %v1295 = vpop.trf.xlu0
        %v1296 = vpop.trf.xlu0
        %v1297 = vpop.trf.xlu0
        %v1298 = vpop.trf.xlu0
        %v1299 = vpop.trf.xlu0
        %v1300 = vpop.trf.xlu0
        %v1301 = vpop.trf.xlu0
        %v1302 = vpop.trf.xlu0
        %v1303 = vpop.trf.xlu0
        %v1304 = vpop.trf.xlu0
        %v1305 = vpop.trf.xlu0
        %v1306 = vpop.trf.xlu0
        %v1307 = vpop.trf.xlu0
        %1308 = vst [vmem:[%s269] sm:$0xff] %v1260
        %1309 = vst [vmem:[%s269 + $0x8] sm:$0xff] %v1292
        %1310 = vxpose.xlu0.b32.start [1/16] %v1149, 128
        %1311 = vxpose.xlu0.b32.cont [2/16] %v1152, 128
        %1312 = vxpose.xlu0.b32.cont [3/16] %v1155, 128
        %1313 = vxpose.xlu0.b32.cont [4/16] %v1158, 128
        %1314 = vxpose.xlu0.b32.cont [5/16] %v1161, 128
        %1315 = vxpose.xlu0.b32.cont [6/16] %v1164, 128
        %1316 = vxpose.xlu0.b32.cont [7/16] %v1167, 128
        %1317 = vxpose.xlu0.b32.cont [8/16] %v1170, 128
        %1318 = vxpose.xlu0.b32.cont [9/16] %v1173, 128
        %1319 = vxpose.xlu0.b32.cont [10/16] %v1176, 128
        %1320 = vxpose.xlu0.b32.cont [11/16] %v1179, 128
        %1321 = vxpose.xlu0.b32.cont [12/16] %v1182, 128
        %1322 = vxpose.xlu0.b32.cont [13/16] %v1185, 128
        %1323 = vxpose.xlu0.b32.cont [14/16] %v1188, 128
        %1324 = vxpose.xlu0.b32.cont [15/16] %v1191, 128
        %1325 = vxpose.xlu0.b32.end [16/16] %v1194, 128
        %v1326 = vpop.trf.xlu0
        %v1327 = vpop.trf.xlu0
        %v1328 = vpop.trf.xlu0
        %v1329 = vpop.trf.xlu0
        %v1330 = vpop.trf.xlu0
        %v1331 = vpop.trf.xlu0
        %v1332 = vpop.trf.xlu0
        %v1333 = vpop.trf.xlu0
        %v1334 = vpop.trf.xlu0
        %v1335 = vpop.trf.xlu0
        %v1336 = vpop.trf.xlu0
        %v1337 = vpop.trf.xlu0
        %v1338 = vpop.trf.xlu0
        %v1339 = vpop.trf.xlu0
        %v1340 = vpop.trf.xlu0
        %v1341 = vpop.trf.xlu0
        %1342 = vxpose.xlu0.b32.start [1/16] %v1197, 128
        %1343 = vxpose.xlu0.b32.cont [2/16] %v1200, 128
        %1344 = vxpose.xlu0.b32.cont [3/16] %v1203, 128
        %1345 = vxpose.xlu0.b32.cont [4/16] %v1206, 128
        %1346 = vxpose.xlu0.b32.cont [5/16] %v1209, 128
        %1347 = vxpose.xlu0.b32.cont [6/16] %v1212, 128
        %1348 = vxpose.xlu0.b32.cont [7/16] %v1215, 128
        %1349 = vxpose.xlu0.b32.cont [8/16] %v1218, 128
        %1350 = vxpose.xlu0.b32.cont [9/16] %v1221, 128
        %1351 = vxpose.xlu0.b32.cont [10/16] %v1224, 128
        %1352 = vxpose.xlu0.b32.cont [11/16] %v1227, 128
        %1353 = vxpose.xlu0.b32.cont [12/16] %v1230, 128
        %1354 = vxpose.xlu0.b32.cont [13/16] %v1233, 128
        %1355 = vxpose.xlu0.b32.cont [14/16] %v1236, 128
        %1356 = vxpose.xlu0.b32.cont [15/16] %v1239, 128
        %1357 = vxpose.xlu0.b32.end [16/16] %v1242, 128
        %v1358 = vpop.trf.xlu0
        %v1359 = vpop.trf.xlu0
        %v1360 = vpop.trf.xlu0
        %v1361 = vpop.trf.xlu0
        %v1362 = vpop.trf.xlu0
        %v1363 = vpop.trf.xlu0
        %v1364 = vpop.trf.xlu0
        %v1365 = vpop.trf.xlu0
        %v1366 = vpop.trf.xlu0
        %v1367 = vpop.trf.xlu0
        %v1368 = vpop.trf.xlu0
        %v1369 = vpop.trf.xlu0
        %v1370 = vpop.trf.xlu0
        %v1371 = vpop.trf.xlu0
        %v1372 = vpop.trf.xlu0
        %v1373 = vpop.trf.xlu0
        %s1374 = scalar_lea.vmem %s269, 16 [#allocation2]
        %1375 = vst [vmem:[%s1374] sm:$0xff] %v1326
        %1376 = vst [vmem:[%s1374 + $0x8] sm:$0xff] %v1358
        %s1377 = sand.u32 %s157, 1
        %s1378 = scalar_lea.sflag [#allocation3], %s1377
        %s1379 = sand.u32 %s157, 1
        %s1380 = smul.addr %s1379, 32
        %s1381 = scalar_lea.vmem [#allocation2], %s1380
        // Predicated region
        $region41: #{tpu_custom_call.1} parent=39 // pred_check
          %p1382 = pneg %p167
        $region42: #{tpu_custom_call.1} parent=39 // pred_check_branch
          %1384 = sbr.rel (%p1382) target = $region44
        $region43: #{tpu_custom_call.1} parent=39 // pred_region
          %1386 = vsyncadd %s1378, 0
          %s1387 = smul.addr %s19, 4
          %s1388 = smul.addr %s1387, 8
          %s1389 = scalar_lea.hbm %s5, %s1388
          %s1390 = sshll.u32 %s1381, 4
          %s1391 = int_to_ptr.vmem [resolvable:$true] %s1390
          %s1392 = sshll.u32 %s1389, 4
          %s1393 = int_to_ptr.hbm [resolvable:$true] %s1392
          %1398 = dma.vmem_to_hbm [thread:$0]  %s1391, 512, %s1393, %s1378, 256, 256, 16
        $region44: #{tpu_custom_call.1} parent=39 // pred_fallthru
          _
      $region40: #{tpu_custom_call.1} parent=5 // pred_fallthru
        _
      %p1399 = scmp.le.s32.totalorder 2, %s14
      // Predicated region
      $region45: #{tpu_custom_call.1} parent=5 // pred_check
        %p1400 = pneg %p1399
      $region46: #{tpu_custom_call.1} parent=5 // pred_check_branch
        %1402 = sbr.rel (%p1400) target = $region48
      $region47: #{tpu_custom_call.1} parent=5 // pred_region
        %s1403 = ssub.s32 %s14, 2
        // Predicated region
        $region49: #{tpu_custom_call.1} parent=47 // pred_check
          %p1404 = pneg %p173
        $region50: #{tpu_custom_call.1} parent=47 // pred_check_branch
          %1406 = sbr.rel (%p1404) target = $region52
        $region51: #{tpu_custom_call.1} parent=47 // pred_region
          %s1407 = sand.u32 %s158, 1
          %s1408 = scalar_lea.sflag [#allocation3], %s1407
          %s1409 = sand.u32 %s158, 1
          %s1410 = smul.addr %s1409, 32
          %s1411 = scalar_lea.vmem [#allocation2], %s1410
          %1413 = dma.done %s1408, 512
        $region52: #{tpu_custom_call.1} parent=47 // pred_fallthru
          _
      $region48: #{tpu_custom_call.1} parent=5 // pred_fallthru
        _
    $region6: #{tpu_custom_call.1} parent=1 // loop_footer
      %s18 = sadd.s32 1, %s14
    $region7: #{tpu_custom_call.1} parent=1 // loop_footer_branch
      %13 = sbr.rel target = $region3
    $region8: #{tpu_custom_call.1} parent=1 // loop_exit
      _
    %1414 = vsyncpa [#allocation3], 1
    %s1415 = scalar_lea.sflag [#allocation3], 1
    %1416 = vsyncpa %s1415, 1

</llo_original>
